<compile_context>
chip_gen: v7x
topology: tpu7x:2x2x1
jax: 0.10.0
libtpu: 0.0.40
codegen_flags: <defaults>
</compile_context>

<pallas_src>
import jax
import jax.numpy as jnp
from jax.experimental import pallas as pl
from jax.experimental.pallas import tpu as pltpu

# FrozenLake-v0: observation_space.n = 16, action_space.n = 4
INPUT_SIZE = 16
NUM_CLASSES = 4


def linear_kernel(w_ref, xt_ref, ot_ref):
    # out_T tile = W @ x_T tile ; f32 accumulation on the MXU.
    ot_ref[...] = jnp.dot(
        w_ref[...], xt_ref[...], preferred_element_type=jnp.float32
    ).astype(ot_ref.dtype)


def net_forward(x, w, *, block_b=512):
    """Forward of Net: out = x @ W^T.

    x: (B, input_size) f32.
    w: (num_classes, input_size) f32 (native PyTorch nn.Linear weight layout).
    Returns (B, num_classes) f32.
    """
    B, D = x.shape
    C, D2 = w.shape
    assert D == D2

    # Batch tiling: single full block for small B, 512-wide lane tiles for large B.
    tb = B if B <= block_b else block_b
    pad = (-B) % tb
    if pad:
        x = jnp.pad(x, ((0, pad), (0, 0)))
    bp = B + pad
    n_blocks = bp // tb

    # Lane-dense layout: batch on the last (lane) axis.  Wrapper-side transpose is
    # pure layout plumbing; the kernel then emits a (C, B) slab with dense stores.
    x_t = x.T  # (D, Bp)

    cost = pl.CostEstimate(
        flops=2 * bp * D * C,
        transcendentals=0,
        bytes_accessed=(bp * D + C * D + bp * C) * 4,
    )

    out_t = pl.pallas_call(
        linear_kernel,
        out_shape=jax.ShapeDtypeStruct((C, bp), jnp.float32),
        grid_spec=pltpu.PrefetchScalarGridSpec(
            num_scalar_prefetch=0,
            grid=(n_blocks,),
            in_specs=[
                # Weight tile is resident across the whole grid (block (0,0) always).
                pl.BlockSpec((C, D), lambda i: (0, 0)),
                pl.BlockSpec((D, tb), lambda i: (0, i)),
            ],
            out_specs=pl.BlockSpec((C, tb), lambda i: (0, i)),
        ),
        compiler_params=pltpu.CompilerParams(
            dimension_semantics=("parallel",),
        ),
        cost_estimate=cost,
    )(w, x_t)

    return out_t.T[:B]  # (B, C), matching nn.Linear output layout


if __name__ == "__main__":
    key = jax.random.PRNGKey(0)
    k_state, k_dense = jax.random.split(key)

    # Deterministic parameters mirroring Net.__init__:
    # nn.Linear(16, 4, bias=False) with weight.data.fill_(1.0).
    w = jnp.ones((NUM_CLASSES, INPUT_SIZE), dtype=jnp.float32)

    # Small batch of FrozenLake-style one-hot state encodings.
    B = 8
    states = jax.random.randint(k_state, (B,), 0, INPUT_SIZE)
    x = jax.nn.one_hot(states, INPUT_SIZE, dtype=jnp.float32)

    out = net_forward(x, w)
    out = jax.block_until_ready(out)
    ref = x @ w.T
    assert out.shape == (B, NUM_CLASSES)
    assert jnp.allclose(out, ref, atol=1e-5, rtol=1e-5)

    # Also exercise the tiled (multi-block, padded) path with a dense batch.
    B2 = 200
    x2 = jax.random.normal(k_dense, (B2, INPUT_SIZE), dtype=jnp.float32)
    out2 = net_forward(x2, w, block_b=128)
    out2 = jax.block_until_ready(out2)
    ref2 = x2 @ w.T
    assert out2.shape == (B2, NUM_CLASSES)
    assert jnp.allclose(out2, ref2, atol=1e-5, rtol=1e-5)

    print("KERNEL_OK")
</pallas_src>

<mosaic_0001>
module attributes {stable_mosaic.version = 11 : i64} {
  func.func @linear_kernel(%arg0: i32, %arg1: memref<4x16xf32, #tpu.memory_space<vmem>>, %arg2: memref<16x8xf32, #tpu.memory_space<vmem>>, %arg3: memref<4x8xf32, #tpu.memory_space<vmem>>) attributes {dimension_semantics = [#tpu.dimension_semantics<parallel>], iteration_bounds = array<i64: 1>, scalar_prefetch = 0 : i64, scratch_operands = 0 : i64, tpu.core_type = #tpu.core_type<tc>, window_params = [{pipeline_mode = #tpu.pipeline_mode<synchronous>, transform_indices = @transform_0, window_bounds = array<i64: 4, 16>}, {transform_indices = @transform_1, window_bounds = array<i64: 16, 8>}, {transform_indices = @transform_2, window_bounds = array<i64: 4, 8>}]} {
    %c0 = arith.constant 0 : index
    %c0_0 = arith.constant 0 : index
    %0 = vector.load %arg1[%c0, %c0_0] : memref<4x16xf32, #tpu.memory_space<vmem>>, vector<4x16xf32>
    %c0_1 = arith.constant 0 : index
    %c0_2 = arith.constant 0 : index
    %1 = vector.load %arg2[%c0_1, %c0_2] : memref<16x8xf32, #tpu.memory_space<vmem>>, vector<16x8xf32>
    %cst = arith.constant dense<0.000000e+00> : vector<4x8xf32>
    %2 = tpu.matmul %0, %1, %cst {dimension_numbers = #tpu.dot_dimension_numbers<[1], [0], [0], [1], [0, 0, 1, 1], [], []>} : vector<4x16xf32>, vector<16x8xf32>, vector<4x8xf32> -> vector<4x8xf32>
    %c0_3 = arith.constant 0 : index
    %c0_4 = arith.constant 0 : index
    %3 = vector.load %arg3[%c0_3, %c0_4] : memref<4x8xf32, #tpu.memory_space<vmem>>, vector<4x8xf32>
    tpu.vector_store %arg3[%c0_3, %c0_4], %2 {strides = array<i32>} : memref<4x8xf32, #tpu.memory_space<vmem>>, vector<4x8xf32>,
    return
  }
  func.func @transform_0(%arg0: i32) -> (i32, i32) {
    %c0_i32 = arith.constant 0 : i32
    %c0_i32_0 = arith.constant 0 : i32
    %c0_i32_1 = arith.constant 0 : i32
    return %c0_i32, %c0_i32_0 : i32, i32
  }
  func.func @transform_1(%arg0: i32) -> (i32, i32) {
    %c0_i32 = arith.constant 0 : i32
    %c0_i32_0 = arith.constant 0 : i32
    return %c0_i32, %arg0 : i32, i32
  }
  func.func @transform_2(%arg0: i32) -> (i32, i32) {
    %c0_i32 = arith.constant 0 : i32
    %c0_i32_0 = arith.constant 0 : i32
    return %c0_i32, %arg0 : i32, i32
  }
}

</mosaic_0001>

<llo_original>
// kernel: tpu_custom_call.1
$region0: #{tpu_custom_call.1}
  #allocation0 [shape = 'u32[]', space=smem, size = 0x4, offset = 0x4, fixed_abs, tag = 'smem constant byte address 0x4 - core index']
  #allocation1 [shape = 'u32[144,128]{1,0:T(1,128)}', space=vmem, size = 0x12000, scoped, tag = 'internal scratch']
  %s0 = inlined_call_operand.vmem [shape: f32[4,16], index: 0, kind: input, shape index: {}]
  %s1 = inlined_call_operand.vmem [shape: f32[16,8], index: 1, kind: input, shape index: {}]
  %s2 = inlined_call_operand.hbm [shape: f32[4,8], index: 2, kind: output, shape index: {}]
  %s3 = sld [smem:[#allocation0]]
  $region18: #{tpu_custom_call.1} parent=0
    _
  %s5 = ssub.s32 1, %s3
  %s6 = scalar_select 0, %s5, %s3
  $region1: #{tpu_custom_call.1} parent=0
    #allocation2 [shape = 'u8[2048]{0}', space=vmem, size = 0x800, scoped, tag = 'output window, operand 0, single buffered']
    #allocation3 [shape = 's32[1]{0}', space=sflag, size = 0x4, scoped, tag = 'scoped memory for tpu_custom_call.1']
    %7 = vsyncpa [#allocation3], 0
    // Predicated region
    $region2: #{tpu_custom_call.1} parent=1 // pred_check
      _
    $region3: #{tpu_custom_call.1} parent=1 // pred_check_branch
      %9 = sbr.rel (0) target = $region5
    $region4: #{tpu_custom_call.1} parent=1 // pred_region
      _
    $region5: #{tpu_custom_call.1} parent=1 // pred_fallthru
      _
    // Predicated region
    $region6: #{tpu_custom_call.1} parent=1 // pred_check
      _
    $region7: #{tpu_custom_call.1} parent=1 // pred_check_branch
      %11 = sbr.rel (0) target = $region9
    $region8: #{tpu_custom_call.1} parent=1 // pred_region
      _
    $region9: #{tpu_custom_call.1} parent=1 // pred_fallthru
      _
    %v12 = vld [vmem:[%s0] sm:$0xf]
    %v13 = vld [vmem:[%s1] sm:$0xff]
    %v14 = vld [vmem:[%s1 + $0x8] sm:$0xff]
    %vm15 = vcmask 130048
    %v17 = vsel %vm15, %v12, 0
    %19 = vmatprep.subr.mxu0 0.0
    %20 = vmatpush1.msra.mxu0 %v13
    %21 = vmatprep.subr.mxu0 0.0
    %22 = vmatpush1.msra.mxu0 %v14
    %23 = vmatprep.subr.mxu0 0.0
    %24 = vmatpush1.msra.mxu0 0.0
    %25 = vmatprep.subr.mxu0 0.0
    %26 = vmatpush1.msra.mxu0 0.0
    %27 = vmatprep.subr.mxu0 0.0
    %28 = vmatpush1.msra.mxu0 0.0
    %29 = vmatprep.subr.mxu0 0.0
    %30 = vmatpush1.msra.mxu0 0.0
    %31 = vmatprep.subr.mxu0 0.0
    %32 = vmatpush1.msra.mxu0 0.0
    %33 = vmatprep.subr.mxu0 0.0
    %34 = vmatpush1.msra.mxu0 0.0
    %35 = vmatprep.subr.mxu0 0.0
    %36 = vmatpush1.msra.mxu0 0.0
    %37 = vmatprep.subr.mxu0 0.0
    %38 = vmatpush1.msra.mxu0 0.0
    %39 = vmatprep.subr.mxu0 0.0
    %40 = vmatpush1.msra.mxu0 0.0
    %41 = vmatprep.subr.mxu0 0.0
    %42 = vmatpush1.msra.mxu0 0.0
    %43 = vmatprep.subr.mxu0 0.0
    %44 = vmatpush1.msra.mxu0 0.0
    %45 = vmatprep.subr.mxu0 0.0
    %46 = vmatpush1.msra.mxu0 0.0
    %47 = vmatprep.subr.mxu0 0.0
    %48 = vmatpush1.msra.mxu0 0.0
    %49 = vmatprep.subr.mxu0 0.0
    %50 = vmatpush1.msra.mxu0 0.0
    %51 = vmatprep.subr.mxu0 0.0
    %52 = vmatpush1.msra.mxu0 0.0
    %53 = vmatprep.subr.mxu0 0.0
    %54 = vmatpush1.msra.mxu0 0.0
    %55 = vmatprep.subr.mxu0 0.0
    %56 = vmatpush1.msra.mxu0 0.0
    %57 = vmatprep.subr.mxu0 0.0
    %58 = vmatpush1.msra.mxu0 0.0
    %59 = vmatprep.subr.mxu0 0.0
    %60 = vmatpush1.msra.mxu0 0.0
    %61 = vmatprep.subr.mxu0 0.0
    %62 = vmatpush1.msra.mxu0 0.0
    %63 = vmatprep.subr.mxu0 0.0
    %64 = vmatpush1.msra.mxu0 0.0
    %65 = vmatprep.subr.mxu0 0.0
    %66 = vmatpush1.msra.mxu0 0.0
    %67 = vmatprep.subr.mxu0 0.0
    %68 = vmatpush1.msra.mxu0 0.0
    %69 = vmatprep.subr.mxu0 0.0
    %70 = vmatpush1.msra.mxu0 0.0
    %71 = vmatprep.subr.mxu0 0.0
    %72 = vmatpush1.msra.mxu0 0.0
    %73 = vmatprep.subr.mxu0 0.0
    %74 = vmatpush1.msra.mxu0 0.0
    %75 = vmatprep.subr.mxu0 0.0
    %76 = vmatpush1.msra.mxu0 0.0
    %77 = vmatprep.subr.mxu0 0.0
    %78 = vmatpush1.msra.mxu0 0.0
    %79 = vmatprep.subr.mxu0 0.0
    %80 = vmatpush1.msra.mxu0 0.0
    %81 = vmatprep.subr.mxu0 0.0
    %82 = vmatpush1.msra.mxu0 0.0
    %83 = vmatprep.mubr.f32.mxu0 0.0
    %84 = vmatmul.mubr.f32.gmra.mrb[0].mxu0 %v17
    %v85 = vpop.f32.mrb[0].mxu0
    %v86 = vadd.f32 0.0, %v85
    %v87 = vpop.f32.mrb[0].mxu0
    %88 = vdwg.mxu0
    %vm89 = vcmask 60416
    %90 = vst.msk [vmem:[#allocation2] sm:$0xf] %vm89, %v86
    // Predicated region
    $region10: #{tpu_custom_call.1} parent=1 // pred_check
      _
    $region11: #{tpu_custom_call.1} parent=1 // pred_check_branch
      %92 = sbr.rel (0) target = $region13
    $region12: #{tpu_custom_call.1} parent=1 // pred_region
      %s94 = ssub.s32 64, 64
      %95 = vsyncadd [#allocation3], %s94
      %s97 = sshll.u32 [#allocation2], 4
      %s98 = int_to_ptr.vmem [resolvable:$true] %s97
      %100 = dma.vmem_to_hbm [thread:$0]  %s98, 64, %s2, [#allocation3]
    $region13: #{tpu_custom_call.1} parent=1 // pred_fallthru
      _
    // Predicated region
    $region14: #{tpu_custom_call.1} parent=1 // pred_check
      _
    $region15: #{tpu_custom_call.1} parent=1 // pred_check_branch
      %102 = sbr.rel (0) target = $region17
    $region16: #{tpu_custom_call.1} parent=1 // pred_region
      %103 = dma.done [#allocation3], 64
    $region17: #{tpu_custom_call.1} parent=1 // pred_fallthru
      _
    %104 = vsyncpa [#allocation3], 1

</llo_original>
